<compile_context>
chip_gen: v5e
topology: v5e:2x2
jax: 0.10.0
libtpu: 0.0.40
codegen_flags: <defaults>
</compile_context>

<pallas_src>
import jax
import jax.numpy as jnp
from jax.experimental import pallas as pl
from jax.experimental.pallas import tpu as pltpu


def _exp_envelope_kernel(d_ref, o_ref):
    d = d_ref[...].astype(jnp.float32)
    inside = d < 1.0
    # Guard: masked branch (d >= 1, NaN, or ragged-boundary garbage) never
    # produces inf/NaN intermediates.
    d_safe = jnp.where(inside, d, 0.0)
    d2 = d_safe * d_safe
    # (1 - d)(1 + d) == 1 - d^2 exactly.
    env = jnp.exp(-d2 * pl.reciprocal(1.0 - d2, approx=False))
    # Final mask is the LAST op before the store: in-bounds lanes can never be
    # contaminated by clipped boundary-block reads.
    o_ref[...] = jnp.where(inside, env, 0.0).astype(o_ref.dtype)


def _cdiv(a, b):
    return -(-a // b)


def _round_up(a, b):
    return _cdiv(a, b) * b


def exponential_envelope(d_scaled, *, donate_input=False):
    """Pallas TPU implementation of ExponentialEnvelope.forward.

    Accepts any shape/dtype.  Flattens to a lane-dense 2-D layout; when the
    element count is a multiple of 128 there is no padding and no output
    slice (pure 1-read + 1-write HBM pass).  `donate_input=True` marks the
    input buffer as may-alias with the output so XLA can reuse it when the
    caller no longer needs d_scaled.
    """
    # TODO(synk): for maximum benefit, fuse this envelope into its radial-basis
    # producer/consumer instead of running it as a standalone memory-bound pass.
    orig_shape = d_scaled.shape
    dtype = d_scaled.dtype
    n = d_scaled.size
    if n == 0:
        return d_scaled

    itemsize = jnp.dtype(dtype).itemsize
    # Sublane packing: f32 -> 8, bf16 -> 16, int8/fp8 -> 32.
    sublane = 8 * max(1, 4 // itemsize)

    # Lane width: widest of {1024, 512, 256, 128} dividing n -> no-pad path.
    lane_c = None
    for c in (1024, 512, 256, 128):
        if n % c == 0:
            lane_c = c
            break
    needs_pad = lane_c is None
    if needs_pad:
        lane_c = 1024 if n >= 8 * 1024 else 128

    rows = _cdiv(n, lane_c)

    # Row tile: target >= 8 grid steps (pipelining + megacore balance on v7x)
    # while capping each block at ~1M elements (~4 MiB f32) so per-step
    # overhead stays negligible without crowding v7x's 64 MiB VMEM.
    max_block_elems = 1024 * 1024
    max_tile_r = max(sublane, (max_block_elems // lane_c) // sublane * sublane)
    if rows <= sublane:
        # Tiny input: one block covering the whole (short) row axis.
        tile_r = rows
    else:
        tile_r = _round_up(_cdiv(rows, 8), sublane)
        tile_r = max(sublane, min(tile_r, max_tile_r))
    grid = _cdiv(rows, tile_r)

    flat = d_scaled.reshape(-1)
    if needs_pad:
        # Only pad up to the next lane multiple (< lane_c extra elements).
        flat = jnp.pad(flat, (0, rows * lane_c - n))
    d2d = flat.reshape(rows, lane_c)

    out = pl.pallas_call(
        _exp_envelope_kernel,
        out_shape=jax.ShapeDtypeStruct((rows, lane_c), dtype),
        grid_spec=pltpu.PrefetchScalarGridSpec(
            num_scalar_prefetch=0,
            grid=(grid,),
            in_specs=[pl.BlockSpec((tile_r, lane_c), lambda i: (i, 0))],
            out_specs=pl.BlockSpec((tile_r, lane_c), lambda i: (i, 0)),
        ),
        compiler_params=pltpu.CompilerParams(
            dimension_semantics=("parallel",),
            # ~16 MiB actually needed (2 bufs x in/out x <=4 MiB); 32 MiB
            # gives headroom while staying well under v7x's 64 MiB VMEM.
            vmem_limit_bytes=32 * 1024 * 1024,
        ),
        cost_estimate=pl.CostEstimate(
            flops=8 * n,
            transcendentals=2 * n,
            bytes_accessed=2 * n * itemsize,
        ),
        input_output_aliases={0: 0} if donate_input else {},
    )(d2d)

    out_flat = out.reshape(-1)
    if needs_pad:
        out_flat = out_flat[:n]
    return out_flat.reshape(orig_shape)


def _reference(d):
    env = jnp.exp(-(d ** 2) / ((1.0 - d) * (1.0 + d)))
    return jnp.where(d < 1.0, env, jnp.zeros_like(d))


if __name__ == "__main__":
    key = jax.random.PRNGKey(0)

    # [num_edges=16, num_radial=256] scaled distances; values both below and
    # above the cutoff (d >= 1) exercise the mask.  n = 4096 -> no-pad path.
    d_scaled = jax.random.uniform(
        key, (16, 256), dtype=jnp.float32, minval=0.0, maxval=1.5
    )
    out = jax.block_until_ready(exponential_envelope(d_scaled))
    ref = _reference(d_scaled)
    assert out.shape == d_scaled.shape
    assert out.dtype == d_scaled.dtype
    assert jnp.allclose(out, ref, atol=1e-6, rtol=1e-6)

    # Irregular element count (1050, not 128-divisible): pad path + ragged
    # boundary block.
    d_odd = jax.random.uniform(
        jax.random.PRNGKey(1), (3, 7, 50), dtype=jnp.float32, minval=0.0, maxval=1.5
    )
    out_odd = jax.block_until_ready(exponential_envelope(d_odd))
    assert out_odd.shape == d_odd.shape
    assert jnp.allclose(out_odd, _reference(d_odd), atol=1e-6, rtol=1e-6)

    # Medium no-pad shape (multi-step grid) with a donated input buffer.
    d_med = jax.random.uniform(
        jax.random.PRNGKey(2), (64, 640), dtype=jnp.float32, minval=0.0, maxval=2.0
    )
    ref_med = _reference(d_med)
    out_med = jax.block_until_ready(
        exponential_envelope(d_med + 0.0, donate_input=True)
    )
    assert jnp.allclose(out_med, ref_med, atol=1e-6, rtol=1e-6)

    print("KERNEL_OK")
</pallas_src>

<mosaic_0001>
module attributes {stable_mosaic.version = 11 : i64} {
  func.func @_exp_envelope_kernel(%arg0: i32, %arg1: memref<4x1024xf32, #tpu.memory_space<vmem>>, %arg2: memref<4x1024xf32, #tpu.memory_space<vmem>>) attributes {dimension_semantics = [#tpu.dimension_semantics<parallel>], iteration_bounds = array<i64: 1>, scalar_prefetch = 0 : i64, scratch_operands = 0 : i64, tpu.core_type = #tpu.core_type<tc>, window_params = [{transform_indices = @transform_0, window_bounds = array<i64: 4, 1024>}, {transform_indices = @transform_1, window_bounds = array<i64: 4, 1024>}]} {
    %c0 = arith.constant 0 : index
    %c0_0 = arith.constant 0 : index
    %0 = vector.load %arg1[%c0, %c0_0] : memref<4x1024xf32, #tpu.memory_space<vmem>>, vector<4x1024xf32>
    %cst = arith.constant 1.000000e+00 : f32
    %1 = vector.broadcast %cst : f32 to vector<4x1024xf32>
    %2 = arith.cmpf olt, %0, %1 : vector<4x1024xf32>
    %cst_1 = arith.constant 0.000000e+00 : f32
    %3 = vector.broadcast %cst_1 : f32 to vector<4x1024xf32>
    %4 = arith.select %2, %0, %3 : vector<4x1024xi1>, vector<4x1024xf32>
    %5 = arith.mulf %4, %4 : vector<4x1024xf32>
    %cst_2 = arith.constant 0.000000e+00 : f32
    %6 = vector.broadcast %cst_2 : f32 to vector<4x1024xf32>
    %7 = arith.subf %6, %5 : vector<4x1024xf32>
    %cst_3 = arith.constant 1.000000e+00 : f32
    %8 = vector.broadcast %cst_3 : f32 to vector<4x1024xf32>
    %9 = arith.subf %8, %5 : vector<4x1024xf32>
    %10 = tpu.reciprocal %9 : vector<4x1024xf32> -> vector<4x1024xf32>
    %11 = arith.mulf %7, %10 : vector<4x1024xf32>
    %12 = math.exp %11 : vector<4x1024xf32>
    %cst_4 = arith.constant 0.000000e+00 : f32
    %13 = vector.broadcast %cst_4 : f32 to vector<4x1024xf32>
    %14 = arith.select %2, %12, %13 : vector<4x1024xi1>, vector<4x1024xf32>
    %c0_5 = arith.constant 0 : index
    %c0_6 = arith.constant 0 : index
    %15 = vector.load %arg2[%c0_5, %c0_6] : memref<4x1024xf32, #tpu.memory_space<vmem>>, vector<4x1024xf32>
    tpu.vector_store %arg2[%c0_5, %c0_6], %14 {strides = array<i32>} : memref<4x1024xf32, #tpu.memory_space<vmem>>, vector<4x1024xf32>,
    return
  }
  func.func @transform_0(%arg0: i32) -> (i32, i32) {
    %c0_i32 = arith.constant 0 : i32
    %c0_i32_0 = arith.constant 0 : i32
    return %arg0, %c0_i32 : i32, i32
  }
  func.func @transform_1(%arg0: i32) -> (i32, i32) {
    %c0_i32 = arith.constant 0 : i32
    %c0_i32_0 = arith.constant 0 : i32
    return %arg0, %c0_i32 : i32, i32
  }
}

</mosaic_0001>

<llo_original>
// kernel: tpu_custom_call.1
$region0: #{tpu_custom_call.1}
  #allocation0 [shape = 'u32[]', space=smem, size = 0x4, offset = 0x4, fixed_abs, tag = 'smem constant byte address 0x4 - core index']
  #allocation1 [shape = 'u32[72,128]{1,0:T(1,128)}', space=vmem, size = 0x9000, scoped, tag = 'internal scratch']
  %s0 = inlined_call_operand.hbm [shape: f32[4,1024], index: 0, kind: input, shape index: {}]
  %s1 = inlined_call_operand.hbm [shape: f32[4,1024], index: 1, kind: output, shape index: {}]
  %s2 = sld [smem:[#allocation0]]
  $region18: #{tpu_custom_call.1} parent=0
    _
  %s4 = ssub.s32 1, %s2
  %s5 = scalar_select 0, %s4, %s2
  $region1: #{tpu_custom_call.1} parent=0
    #allocation2 [shape = 'u8[16384]{0}', space=vmem, size = 0x4000, scoped, tag = 'input window, operand 0, single buffered']
    #allocation3 [shape = 's32[1]{0}', space=sflag, size = 0x4, scoped, tag = 'scoped memory for tpu_custom_call.1']
    #allocation4 [shape = 's32[1]{0}', space=sflag, size = 0x4, scoped, tag = 'scoped memory for tpu_custom_call.1']
    #allocation5 [shape = 'u8[16384]{0}', space=vmem, size = 0x4000, scoped, tag = 'output window, operand 0, single buffered']
    %6 = vsyncpa [#allocation3], 0
    %7 = vsyncpa [#allocation4], 0
    // Predicated region
    $region2: #{tpu_custom_call.1} parent=1 // pred_check
      _
    $region3: #{tpu_custom_call.1} parent=1 // pred_check_branch
      %9 = sbr.rel (0) target = $region5
    $region4: #{tpu_custom_call.1} parent=1 // pred_region
      %11 = vsyncadd [#allocation3], 0
      %s13 = sshll.u32 %s0, 4
      %s14 = int_to_ptr.hbm [resolvable:$true] %s13
      %s15 = sshll.u32 [#allocation2], 4
      %s16 = int_to_ptr.vmem [resolvable:$true] %s15
      %18 = dma.hbm_to_vmem [thread:$0]  %s14, 512, %s16, [#allocation3]
    $region5: #{tpu_custom_call.1} parent=1 // pred_fallthru
      _
    // Predicated region
    $region6: #{tpu_custom_call.1} parent=1 // pred_check
      _
    $region7: #{tpu_custom_call.1} parent=1 // pred_check_branch
      %20 = sbr.rel (0) target = $region9
    $region8: #{tpu_custom_call.1} parent=1 // pred_region
      %22 = dma.done [#allocation3], 512
    $region9: #{tpu_custom_call.1} parent=1 // pred_fallthru
      _
    %v23 = vld [vmem:[#allocation2] sm:$0xff]
    %v24 = vld [vmem:[#allocation2 + $0x8] sm:$0xff]
    %v25 = vld [vmem:[#allocation2 + $0x10] sm:$0xff]
    %v26 = vld [vmem:[#allocation2 + $0x18] sm:$0xff]
    %vm27 = vcmp.lt.f32.partialorder %v23, 1.0
    %vm28 = vcmp.lt.f32.partialorder %v24, 1.0
    %vm29 = vcmp.lt.f32.partialorder %v25, 1.0
    %vm30 = vcmp.lt.f32.partialorder %v26, 1.0
    %v31 = vsel %vm27, %v23, 0.0
    %v32 = vsel %vm28, %v24, 0.0
    %v33 = vsel %vm29, %v25, 0.0
    %v34 = vsel %vm30, %v26, 0.0
    %v35 = vmul.f32 %v31, %v31
    %v36 = vmul.f32 %v32, %v32
    %v37 = vmul.f32 %v33, %v33
    %v38 = vmul.f32 %v34, %v34
    %v39 = vsub.f32 0.0, %v35
    %v40 = vsub.f32 0.0, %v36
    %v41 = vsub.f32 0.0, %v37
    %v42 = vsub.f32 0.0, %v38
    %v43 = vsub.f32 1.0, %v35
    %v44 = vsub.f32 1.0, %v36
    %v45 = vsub.f32 1.0, %v37
    %v46 = vsub.f32 1.0, %v38
    %v47 = vrcp.pop %v43
    %v48 = vmul.f32 %v43, %v47
    %v49 = vsub.f32 1.0, %v48
    %v50 = vmul.f32 %v47, %v49
    %v51 = vadd.f32 %v47, %v50
    %vm52 = vweird.f32 %v43
    %vm53 = vweird.f32 %v47
    %vm54 = vmor %vm52, %vm53
    %v55 = vsel %vm54, %v47, %v51
    %v56 = vand.u32 2147483647, %v43
    %vm57 = vcmp.eq.f32.partialorder %v56, 8.507059e+37
    %v58 = vand.u32 %v43, 2147483648
    %v59 = vor.u32 1.1754944e-38, %v58
    %v60 = vsel %vm57, %v59, %v55
    %v61 = vrcp.pop %v44
    %v62 = vmul.f32 %v44, %v61
    %v63 = vsub.f32 1.0, %v62
    %v64 = vmul.f32 %v61, %v63
    %v65 = vadd.f32 %v61, %v64
    %vm66 = vweird.f32 %v44
    %vm67 = vweird.f32 %v61
    %vm68 = vmor %vm66, %vm67
    %v69 = vsel %vm68, %v61, %v65
    %v70 = vand.u32 2147483647, %v44
    %vm71 = vcmp.eq.f32.partialorder %v70, 8.507059e+37
    %v72 = vand.u32 %v44, 2147483648
    %v73 = vor.u32 1.1754944e-38, %v72
    %v74 = vsel %vm71, %v73, %v69
    %v75 = vrcp.pop %v45
    %v76 = vmul.f32 %v45, %v75
    %v77 = vsub.f32 1.0, %v76
    %v78 = vmul.f32 %v75, %v77
    %v79 = vadd.f32 %v75, %v78
    %vm80 = vweird.f32 %v45
    %vm81 = vweird.f32 %v75
    %vm82 = vmor %vm80, %vm81
    %v83 = vsel %vm82, %v75, %v79
    %v84 = vand.u32 2147483647, %v45
    %vm85 = vcmp.eq.f32.partialorder %v84, 8.507059e+37
    %v86 = vand.u32 %v45, 2147483648
    %v87 = vor.u32 1.1754944e-38, %v86
    %v88 = vsel %vm85, %v87, %v83
    %v89 = vrcp.pop %v46
    %v90 = vmul.f32 %v46, %v89
    %v91 = vsub.f32 1.0, %v90
    %v92 = vmul.f32 %v89, %v91
    %v93 = vadd.f32 %v89, %v92
    %vm94 = vweird.f32 %v46
    %vm95 = vweird.f32 %v89
    %vm96 = vmor %vm94, %vm95
    %v97 = vsel %vm96, %v89, %v93
    %v98 = vand.u32 2147483647, %v46
    %vm99 = vcmp.eq.f32.partialorder %v98, 8.507059e+37
    %v100 = vand.u32 %v46, 2147483648
    %v101 = vor.u32 1.1754944e-38, %v100
    %v102 = vsel %vm99, %v101, %v97
    %v103 = vmul.f32 %v39, %v60
    %v104 = vmul.f32 %v40, %v74
    %v105 = vmul.f32 %v41, %v88
    %v106 = vmul.f32 %v42, %v102
    %v107 = vmul.f32 %v103, 1.442695
    %v108 = vpow.pop %v107
    %v109 = vmul.f32 %v104, 1.442695
    %v110 = vpow.pop %v109
    %v111 = vmul.f32 %v105, 1.442695
    %v112 = vpow.pop %v111
    %v113 = vmul.f32 %v106, 1.442695
    %v114 = vpow.pop %v113
    %v115 = vsel %vm27, %v108, 0.0
    %v116 = vsel %vm28, %v110, 0.0
    %v117 = vsel %vm29, %v112, 0.0
    %v118 = vsel %vm30, %v114, 0.0
    %119 = vst [vmem:[#allocation5] sm:$0xff] %v115
    %120 = vst [vmem:[#allocation5 + $0x8] sm:$0xff] %v116
    %121 = vst [vmem:[#allocation5 + $0x10] sm:$0xff] %v117
    %122 = vst [vmem:[#allocation5 + $0x18] sm:$0xff] %v118
    // Predicated region
    $region10: #{tpu_custom_call.1} parent=1 // pred_check
      _
    $region11: #{tpu_custom_call.1} parent=1 // pred_check_branch
      %124 = sbr.rel (0) target = $region13
    $region12: #{tpu_custom_call.1} parent=1 // pred_region
      %126 = vsyncadd [#allocation4], 0
      %s128 = sshll.u32 [#allocation5], 4
      %s129 = int_to_ptr.vmem [resolvable:$true] %s128
      %s130 = sshll.u32 %s1, 4
      %s131 = int_to_ptr.hbm [resolvable:$true] %s130
      %133 = dma.vmem_to_hbm [thread:$0]  %s129, 512, %s131, [#allocation4]
    $region13: #{tpu_custom_call.1} parent=1 // pred_fallthru
      _
    // Predicated region
    $region14: #{tpu_custom_call.1} parent=1 // pred_check
      _
    $region15: #{tpu_custom_call.1} parent=1 // pred_check_branch
      %135 = sbr.rel (0) target = $region17
    $region16: #{tpu_custom_call.1} parent=1 // pred_region
      %137 = dma.done [#allocation4], 512
    $region17: #{tpu_custom_call.1} parent=1 // pred_fallthru
      _
    %138 = vsyncpa [#allocation3], 1
    %139 = vsyncpa [#allocation4], 1

</llo_original>
